<compile_context>
chip_gen: v7x
topology: tpu7x:2x2x1
jax: 0.10.0
libtpu: 0.0.40
codegen_flags: <defaults>
</compile_context>

<pallas_src>
import functools

import jax
import jax.numpy as jnp
from jax.experimental import pallas as pl
from jax.experimental.pallas import tpu as pltpu


IN_FEATURES = 20
HIDDEN = 256
OUT_FEATURES = 10


def _round_up(n, m):
    return ((n + m - 1) // m) * m


def mlp_kernel(x_ref, w1_ref, b1_ref, w2_ref, b2_ref, o_ref):
    # Cast input to bf16 in-kernel (free VPU work hidden under DMA/MXU).
    x = x_ref[...].astype(jnp.bfloat16)
    # hidden = relu(X @ W1 + b1); bf16 operands, f32 accumulation.
    h = jnp.dot(x, w1_ref[...], preferred_element_type=jnp.float32)
    h = jnp.maximum(h + b1_ref[...], 0.0)          # bias add + ReLU in f32
    # out = hidden @ W2 + b2
    out = jnp.dot(h.astype(jnp.bfloat16), w2_ref[...],
                  preferred_element_type=jnp.float32)
    o_ref[...] = (out + b2_ref[...]).astype(o_ref.dtype)


def prepare_params(w1, b1, w2, b2):
    """One-time weight prep (run once, not per forward call).

    w1: (20, 256), b1: (256,), w2: (256, 10), b2: (10,) — weights stored as
    (in_features, out_features), i.e. the transpose of PyTorch's Linear.weight.
    """
    w1b = w1.astype(jnp.bfloat16)
    w2b = w2.astype(jnp.bfloat16)
    b1r = b1.reshape(1, HIDDEN).astype(jnp.float32)
    b2r = b2.reshape(1, OUT_FEATURES).astype(jnp.float32)
    return w1b, b1r, w2b, b2r


def _choose_tile(B, tb):
    """Pick a batch tile: multiple of 8, <= tb, and >=2 grid steps when possible."""
    tb = max(8, (tb // 8) * 8)                       # enforce sublane divisibility
    half = max(8, _round_up(pl.cdiv(B, 2), 8))       # aim for >=2 steps (v7x 2 TCs)
    TB = min(tb, half)
    if TB >= B:
        TB = B                                       # single block == full dim: legal
    return TB


def mlp_forward(x, params, *, tb=2048):
    """x: (B, 20) f32 -> (B, 10) f32.

    `params` = prepare_params(w1, b1, w2, b2).
    tb: batch tile (sweep 1024-4096; keep <= 4096 on v5e's 16 MiB scoped VMEM).
    """
    w1b, b1r, w2b, b2r = params
    B, K = x.shape
    H = w1b.shape[1]

    TB = _choose_tile(B, tb)
    grid = (pl.cdiv(B, TB),)                         # ragged last block handled by Pallas

    return pl.pallas_call(
        mlp_kernel,
        out_shape=jax.ShapeDtypeStruct((B, OUT_FEATURES), jnp.float32),
        grid_spec=pltpu.PrefetchScalarGridSpec(
            num_scalar_prefetch=0,
            grid=grid,
            in_specs=[
                # x tile streams over the batch grid (double-buffered DMA), f32.
                pl.BlockSpec((TB, K), lambda i: (i, 0)),
                # weights/biases: constant index_map -> resident in VMEM.
                pl.BlockSpec((K, H), lambda i: (0, 0)),
                pl.BlockSpec((1, H), lambda i: (0, 0)),
                pl.BlockSpec((H, OUT_FEATURES), lambda i: (0, 0)),
                pl.BlockSpec((1, OUT_FEATURES), lambda i: (0, 0)),
            ],
            # Output written directly at (B, 10): last dim == full array dim (legal);
            # avoids the padded buffer + post-kernel slice copy entirely.
            out_specs=pl.BlockSpec((TB, OUT_FEATURES), lambda i: (i, 0)),
        ),
        compiler_params=pltpu.CompilerParams(
            dimension_semantics=("parallel",),
        ),
    )(x, w1b, b1r, w2b, b2r)


def init_params(key):
    """Deterministic init matching the PyTorch module's parameter shapes.
    PyTorch nn.Linear(in, out) holds weight (out, in); we store the transpose."""
    k1, k2, k3, k4 = jax.random.split(key, 4)
    bound1 = 1.0 / (IN_FEATURES ** 0.5)
    bound2 = 1.0 / (HIDDEN ** 0.5)
    w1 = jax.random.uniform(k1, (IN_FEATURES, HIDDEN), jnp.float32, -bound1, bound1)
    b1 = jax.random.uniform(k2, (HIDDEN,), jnp.float32, -bound1, bound1)
    w2 = jax.random.uniform(k3, (HIDDEN, OUT_FEATURES), jnp.float32, -bound2, bound2)
    b2 = jax.random.uniform(k4, (OUT_FEATURES,), jnp.float32, -bound2, bound2)
    return w1, b1, w2, b2


if __name__ == "__main__":
    key = jax.random.PRNGKey(0)
    kx, kp = jax.random.split(key)

    # batch=12 is intentionally not a multiple of the tile so the ragged last
    # grid block (and the >=2-step grid path) is exercised at small scale.
    batch = 12
    x = jax.random.normal(kx, (batch, IN_FEATURES), jnp.float32)
    w1, b1, w2, b2 = init_params(kp)

    params = prepare_params(w1, b1, w2, b2)          # one-time weight prep
    fwd = functools.partial(mlp_forward, tb=2048)

    out = fwd(x, params)
    jax.block_until_ready(out)
    assert out.shape == (batch, OUT_FEATURES)

    # Precision-matched reference (bf16 matmul operands, f32 accumulation).
    h_ref = jnp.dot(x.astype(jnp.bfloat16), w1.astype(jnp.bfloat16),
                    preferred_element_type=jnp.float32) + b1
    h_ref = jnp.maximum(h_ref, 0.0)
    ref = jnp.dot(h_ref.astype(jnp.bfloat16), w2.astype(jnp.bfloat16),
                  preferred_element_type=jnp.float32) + b2
    assert jnp.allclose(out, ref, atol=1e-3, rtol=1e-3), \
        f"max abs err {jnp.max(jnp.abs(out - ref))}"

    # Loose check against full-f32 math (bf16 matmul rounding only).
    ref_f32 = jnp.maximum(x @ w1 + b1, 0.0) @ w2 + b2
    assert jnp.allclose(out, ref_f32, atol=5e-2, rtol=5e-2)

    print("KERNEL_OK")
</pallas_src>

<mosaic_0001>
module attributes {stable_mosaic.version = 11 : i64} {
  func.func @mlp_kernel(%arg0: i32, %arg1: memref<8x20xf32, #tpu.memory_space<vmem>>, %arg2: memref<20x256xbf16, #tpu.memory_space<vmem>>, %arg3: memref<1x256xf32, #tpu.memory_space<vmem>>, %arg4: memref<256x10xbf16, #tpu.memory_space<vmem>>, %arg5: memref<1x10xf32, #tpu.memory_space<vmem>>, %arg6: memref<8x10xf32, #tpu.memory_space<vmem>>) attributes {dimension_semantics = [#tpu.dimension_semantics<parallel>], iteration_bounds = array<i64: 2>, scalar_prefetch = 0 : i64, scratch_operands = 0 : i64, tpu.core_type = #tpu.core_type<tc>, window_params = [{transform_indices = @transform_0, window_bounds = array<i64: 8, 20>}, {pipeline_mode = #tpu.pipeline_mode<synchronous>, transform_indices = @transform_1, window_bounds = array<i64: 20, 256>}, {pipeline_mode = #tpu.pipeline_mode<synchronous>, transform_indices = @transform_2, window_bounds = array<i64: 1, 256>}, {pipeline_mode = #tpu.pipeline_mode<synchronous>, transform_indices = @transform_3, window_bounds = array<i64: 256, 10>}, {pipeline_mode = #tpu.pipeline_mode<synchronous>, transform_indices = @transform_4, window_bounds = array<i64: 1, 10>}, {transform_indices = @transform_5, window_bounds = array<i64: 8, 10>}]} {
    %c0 = arith.constant 0 : index
    %c0_0 = arith.constant 0 : index
    %0 = vector.load %arg1[%c0, %c0_0] : memref<8x20xf32, #tpu.memory_space<vmem>>, vector<8x20xf32>
    %1 = arith.truncf %0 : vector<8x20xf32> to vector<8x20xbf16>
    %c0_1 = arith.constant 0 : index
    %c0_2 = arith.constant 0 : index
    %2 = vector.load %arg2[%c0_1, %c0_2] : memref<20x256xbf16, #tpu.memory_space<vmem>>, vector<20x256xbf16>
    %cst = arith.constant dense<0.000000e+00> : vector<8x256xf32>
    %3 = tpu.matmul %1, %2, %cst {dimension_numbers = #tpu.dot_dimension_numbers<[1], [0], [0], [1], [0, 0, 1, 1], [], []>} : vector<8x20xbf16>, vector<20x256xbf16>, vector<8x256xf32> -> vector<8x256xf32>
    %c0_3 = arith.constant 0 : index
    %c0_4 = arith.constant 0 : index
    %4 = vector.load %arg3[%c0_3, %c0_4] : memref<1x256xf32, #tpu.memory_space<vmem>>, vector<1x256xf32>
    %5 = vector.broadcast %4 : vector<1x256xf32> to vector<8x256xf32>
    %6 = arith.addf %3, %5 : vector<8x256xf32>
    %cst_5 = arith.constant 0.000000e+00 : f32
    %7 = vector.broadcast %cst_5 : f32 to vector<8x256xf32>
    %8 = arith.maximumf %6, %7 : vector<8x256xf32>
    %9 = arith.truncf %8 : vector<8x256xf32> to vector<8x256xbf16>
    %c0_6 = arith.constant 0 : index
    %c0_7 = arith.constant 0 : index
    %10 = vector.load %arg4[%c0_6, %c0_7] : memref<256x10xbf16, #tpu.memory_space<vmem>>, vector<256x10xbf16>
    %cst_8 = arith.constant dense<0.000000e+00> : vector<8x10xf32>
    %11 = tpu.matmul %9, %10, %cst_8 {dimension_numbers = #tpu.dot_dimension_numbers<[1], [0], [0], [1], [0, 0, 1, 1], [], []>} : vector<8x256xbf16>, vector<256x10xbf16>, vector<8x10xf32> -> vector<8x10xf32>
    %c0_9 = arith.constant 0 : index
    %c0_10 = arith.constant 0 : index
    %12 = vector.load %arg5[%c0_9, %c0_10] : memref<1x10xf32, #tpu.memory_space<vmem>>, vector<1x10xf32>
    %13 = vector.broadcast %12 : vector<1x10xf32> to vector<8x10xf32>
    %14 = arith.addf %11, %13 : vector<8x10xf32>
    %c0_11 = arith.constant 0 : index
    %c0_12 = arith.constant 0 : index
    %15 = vector.load %arg6[%c0_11, %c0_12] : memref<8x10xf32, #tpu.memory_space<vmem>>, vector<8x10xf32>
    tpu.vector_store %arg6[%c0_11, %c0_12], %14 {strides = array<i32>} : memref<8x10xf32, #tpu.memory_space<vmem>>, vector<8x10xf32>,
    return
  }
  func.func @transform_0(%arg0: i32) -> (i32, i32) {
    %c0_i32 = arith.constant 0 : i32
    %c0_i32_0 = arith.constant 0 : i32
    return %arg0, %c0_i32 : i32, i32
  }
  func.func @transform_1(%arg0: i32) -> (i32, i32) {
    %c0_i32 = arith.constant 0 : i32
    %c0_i32_0 = arith.constant 0 : i32
    %c0_i32_1 = arith.constant 0 : i32
    return %c0_i32, %c0_i32_0 : i32, i32
  }
  func.func @transform_2(%arg0: i32) -> (i32, i32) {
    %c0_i32 = arith.constant 0 : i32
    %c0_i32_0 = arith.constant 0 : i32
    %c0_i32_1 = arith.constant 0 : i32
    return %c0_i32, %c0_i32_0 : i32, i32
  }
  func.func @transform_3(%arg0: i32) -> (i32, i32) {
    %c0_i32 = arith.constant 0 : i32
    %c0_i32_0 = arith.constant 0 : i32
    %c0_i32_1 = arith.constant 0 : i32
    return %c0_i32, %c0_i32_0 : i32, i32
  }
  func.func @transform_4(%arg0: i32) -> (i32, i32) {
    %c0_i32 = arith.constant 0 : i32
    %c0_i32_0 = arith.constant 0 : i32
    %c0_i32_1 = arith.constant 0 : i32
    return %c0_i32, %c0_i32_0 : i32, i32
  }
  func.func @transform_5(%arg0: i32) -> (i32, i32) {
    %c0_i32 = arith.constant 0 : i32
    %c0_i32_0 = arith.constant 0 : i32
    return %arg0, %c0_i32 : i32, i32
  }
}

</mosaic_0001>

<llo_original>
// kernel: tpu_custom_call.1
$region0: #{tpu_custom_call.1}
  #allocation0 [shape = 'u32[]', space=smem, size = 0x4, offset = 0x4, fixed_abs, tag = 'smem constant byte address 0x4 - core index']
  #allocation1 [shape = 'u32[144,128]{1,0:T(1,128)}', space=vmem, size = 0x12000, scoped, tag = 'internal scratch']
  %s0 = inlined_call_operand.vmem [shape: f32[12,20], index: 0, kind: input, shape index: {}]
  %s1 = inlined_call_operand.vmem [shape: bf16[20,256], index: 1, kind: input, shape index: {}]
  %s2 = inlined_call_operand.vmem [shape: f32[1,256], index: 2, kind: input, shape index: {}]
  %s3 = inlined_call_operand.vmem [shape: bf16[256,10], index: 3, kind: input, shape index: {}]
  %s4 = inlined_call_operand.vmem [shape: f32[1,10], index: 4, kind: input, shape index: {}]
  %s5 = inlined_call_operand.hbm [shape: f32[12,10], index: 5, kind: output, shape index: {}]
  %s6 = sld [smem:[#allocation0]]
  $region53: #{tpu_custom_call.1} parent=0
    _
  %s8 = ssub.s32 1, %s6
  %s9 = scalar_select 0, %s8, %s6
  $region1: #{tpu_custom_call.1} parent=0
    #allocation2 [shape = 'u8[8192]{0}', space=vmem, size = 0x2000, scoped, tag = 'output window, operand 0']
    #allocation3 [shape = 's32[2]{0}', space=sflag, size = 0x8, scoped, tag = 'scoped memory for tpu_custom_call.1']
    %10 = vsyncpa [#allocation3], 0
    %s11 = scalar_lea.sflag [#allocation3], 1
    %12 = vsyncpa %s11, 0
    loop: start=0, step=1, limit=4
    $region2: #{tpu_custom_call.1} parent=1 // loop_pre_header
      _
    $region3: #{tpu_custom_call.1} parent=1 // loop_header
      %s14 = sphi 0, %s18
      %p15 = scmp.ge.s32.totalorder %s14, 4
      %s24 = sphi 0, %s26
      %s27 = sphi 0, %s24
      %s28 = sphi 0, %s27
      %s44 = sphi 0, %s28
      %s48 = sphi 0, %s48
      %s50 = sphi 0, %s48
      %s51 = sphi 0, %s50
      %s65 = sphi 0, %s51
      %s69 = sphi 0, %s69
      %s71 = sphi 0, %s69
      %s72 = sphi 0, %s71
      %s86 = sphi 0, %s72
      %s90 = sphi 0, %s90
      %s92 = sphi 0, %s90
      %s93 = sphi 0, %s92
      %s107 = sphi 0, %s93
      %s111 = sphi 0, %s111
      %s113 = sphi 0, %s111
      %s114 = sphi 0, %s113
      %s128 = sphi 0, %s114
      %s134 = sphi 0, %s136
      %s137 = sphi 0, %s134
      %s138 = sphi 0, %s137
      %s154 = sphi 0, %s138
    $region4: #{tpu_custom_call.1} parent=1 // loop_header_branch
      %17 = sbr.rel (%p15) target = $region8
    $region5: #{tpu_custom_call.1} parent=1 // loop_body
      %s19 = ssub.s32 %s14, 1
      %s20 = ssub.s32 %s14, 2
      %s21 = sadd.s32 %s14, 1
      %s22 = ssub.s32 %s14, %s21
      %p23 = scmp.eq.s32.totalorder %s22, 0
      %s25 = sadd.s32 %s24, 1
      %s26 = scalar_select %p23, %s24, %s25
      %p29 = pneg %p23
      %p30 = scmp.eq.s32.totalorder %s14, 1
      %p31 = por %p29, %p30
      %p32 = scmp.ne.s32.totalorder %s24, %s27
      %p33 = scmp.eq.s32.totalorder %s14, 0
      %p34 = por %p32, %p33
      %p35 = scmp.ne.s32.totalorder %s24, %s27
      %p36 = scmp.eq.s32.totalorder %s19, 1
      %p37 = por %p35, %p36
      %p38 = scmp.ne.s32.totalorder %s27, %s28
      %p39 = scmp.eq.s32.totalorder %s19, 0
      %p40 = por %p38, %p39
      %p41 = scmp.ne.s32.totalorder %s27, %s28
      %p42 = scmp.eq.s32.totalorder %s20, 1
      %p43 = por %p41, %p42
      %p45 = scmp.ne.s32.totalorder %s28, %s44
      %p46 = scmp.eq.s32.totalorder %s20, 0
      %p47 = por %p45, %p46
      %s49 = sadd.s32 %s48, 1
      %p52 = scmp.eq.s32.totalorder %s14, 1
      %p53 = scmp.ne.s32.totalorder %s48, %s50
      %p54 = scmp.eq.s32.totalorder %s14, 0
      %p55 = por %p53, %p54
      %p56 = scmp.ne.s32.totalorder %s48, %s50
      %p57 = scmp.eq.s32.totalorder %s19, 1
      %p58 = por %p56, %p57
      %p59 = scmp.ne.s32.totalorder %s50, %s51
      %p60 = scmp.eq.s32.totalorder %s19, 0
      %p61 = por %p59, %p60
      %p62 = scmp.ne.s32.totalorder %s50, %s51
      %p63 = scmp.eq.s32.totalorder %s20, 1
      %p64 = por %p62, %p63
      %p66 = scmp.ne.s32.totalorder %s51, %s65
      %p67 = scmp.eq.s32.totalorder %s20, 0
      %p68 = por %p66, %p67
      %s70 = sadd.s32 %s69, 1
      %p73 = scmp.eq.s32.totalorder %s14, 1
      %p74 = scmp.ne.s32.totalorder %s69, %s71
      %p75 = scmp.eq.s32.totalorder %s14, 0
      %p76 = por %p74, %p75
      %p77 = scmp.ne.s32.totalorder %s69, %s71
      %p78 = scmp.eq.s32.totalorder %s19, 1
      %p79 = por %p77, %p78
      %p80 = scmp.ne.s32.totalorder %s71, %s72
      %p81 = scmp.eq.s32.totalorder %s19, 0
      %p82 = por %p80, %p81
      %p83 = scmp.ne.s32.totalorder %s71, %s72
      %p84 = scmp.eq.s32.totalorder %s20, 1
      %p85 = por %p83, %p84
      %p87 = scmp.ne.s32.totalorder %s72, %s86
      %p88 = scmp.eq.s32.totalorder %s20, 0
      %p89 = por %p87, %p88
      %s91 = sadd.s32 %s90, 1
      %p94 = scmp.eq.s32.totalorder %s14, 1
      %p95 = scmp.ne.s32.totalorder %s90, %s92
      %p96 = scmp.eq.s32.totalorder %s14, 0
      %p97 = por %p95, %p96
      %p98 = scmp.ne.s32.totalorder %s90, %s92
      %p99 = scmp.eq.s32.totalorder %s19, 1
      %p100 = por %p98, %p99
      %p101 = scmp.ne.s32.totalorder %s92, %s93
      %p102 = scmp.eq.s32.totalorder %s19, 0
      %p103 = por %p101, %p102
      %p104 = scmp.ne.s32.totalorder %s92, %s93
      %p105 = scmp.eq.s32.totalorder %s20, 1
      %p106 = por %p104, %p105
      %p108 = scmp.ne.s32.totalorder %s93, %s107
      %p109 = scmp.eq.s32.totalorder %s20, 0
      %p110 = por %p108, %p109
      %s112 = sadd.s32 %s111, 1
      %p115 = scmp.eq.s32.totalorder %s14, 1
      %p116 = scmp.ne.s32.totalorder %s111, %s113
      %p117 = scmp.eq.s32.totalorder %s14, 0
      %p118 = por %p116, %p117
      %p119 = scmp.ne.s32.totalorder %s111, %s113
      %p120 = scmp.eq.s32.totalorder %s19, 1
      %p121 = por %p119, %p120
      %p122 = scmp.ne.s32.totalorder %s113, %s114
      %p123 = scmp.eq.s32.totalorder %s19, 0
      %p124 = por %p122, %p123
      %p125 = scmp.ne.s32.totalorder %s113, %s114
      %p126 = scmp.eq.s32.totalorder %s20, 1
      %p127 = por %p125, %p126
      %p129 = scmp.ne.s32.totalorder %s114, %s128
      %p130 = scmp.eq.s32.totalorder %s20, 0
      %p131 = por %p129, %p130
      %s132 = ssub.s32 %s14, %s21
      %p133 = scmp.eq.s32.totalorder %s132, 0
      %s135 = sadd.s32 %s134, 1
      %s136 = scalar_select %p133, %s134, %s135
      %p139 = pneg %p133
      %p140 = scmp.eq.s32.totalorder %s14, 1
      %p141 = por %p139, %p140
      %p142 = scmp.ne.s32.totalorder %s134, %s137
      %p143 = scmp.eq.s32.totalorder %s14, 0
      %p144 = por %p142, %p143
      %p145 = scmp.ne.s32.totalorder %s134, %s137
      %p146 = scmp.eq.s32.totalorder %s19, 1
      %p147 = por %p145, %p146
      %p148 = scmp.ne.s32.totalorder %s137, %s138
      %p149 = scmp.eq.s32.totalorder %s19, 0
      %p150 = por %p148, %p149
      %p151 = scmp.ne.s32.totalorder %s137, %s138
      %p152 = scmp.eq.s32.totalorder %s20, 1
      %p153 = por %p151, %p152
      %p155 = scmp.ne.s32.totalorder %s138, %s154
      %p156 = scmp.eq.s32.totalorder %s20, 0
      %p157 = por %p155, %p156
      %p158 = scmp.le.s32.totalorder 1, %s14
      %p159 = scmp.lt.s32.totalorder %s14, 3
      %p160 = pnand %p158, %p159
      %p161 = pneg %p160
      // Predicated region
      $region9: #{tpu_custom_call.1} parent=5 // pred_check
        _
      $region10: #{tpu_custom_call.1} parent=5 // pred_check_branch
        %163 = sbr.rel (%p160) target = $region12
      $region11: #{tpu_custom_call.1} parent=5 // pred_region
        %s164 = ssub.s32 %s14, 1
        // Predicated region
        $region13: #{tpu_custom_call.1} parent=11 // pred_check
          %p165 = pneg %p61
        $region14: #{tpu_custom_call.1} parent=11 // pred_check_branch
          %167 = sbr.rel (%p165) target = $region16
        $region15: #{tpu_custom_call.1} parent=11 // pred_region
          _
        $region16: #{tpu_custom_call.1} parent=11 // pred_fallthru
          _
        // Predicated region
        $region17: #{tpu_custom_call.1} parent=11 // pred_check
          %p168 = pneg %p82
        $region18: #{tpu_custom_call.1} parent=11 // pred_check_branch
          %170 = sbr.rel (%p168) target = $region20
        $region19: #{tpu_custom_call.1} parent=11 // pred_region
          _
        $region20: #{tpu_custom_call.1} parent=11 // pred_fallthru
          _
        // Predicated region
        $region21: #{tpu_custom_call.1} parent=11 // pred_check
          %p171 = pneg %p103
        $region22: #{tpu_custom_call.1} parent=11 // pred_check_branch
          %173 = sbr.rel (%p171) target = $region24
        $region23: #{tpu_custom_call.1} parent=11 // pred_region
          _
        $region24: #{tpu_custom_call.1} parent=11 // pred_fallthru
          _
        // Predicated region
        $region25: #{tpu_custom_call.1} parent=11 // pred_check
          %p174 = pneg %p124
        $region26: #{tpu_custom_call.1} parent=11 // pred_check_branch
          %176 = sbr.rel (%p174) target = $region28
        $region27: #{tpu_custom_call.1} parent=11 // pred_region
          _
        $region28: #{tpu_custom_call.1} parent=11 // pred_fallthru
          _
      $region12: #{tpu_custom_call.1} parent=5 // pred_fallthru
        _
      %p177 = scmp.lt.s32.totalorder %s14, 2
      // Predicated region
      $region29: #{tpu_custom_call.1} parent=5 // pred_check
        %p178 = pneg %p177
      $region30: #{tpu_custom_call.1} parent=5 // pred_check_branch
        %180 = sbr.rel (%p178) target = $region32
      $region31: #{tpu_custom_call.1} parent=5 // pred_region
        // Predicated region
        $region33: #{tpu_custom_call.1} parent=31 // pred_check
          %p181 = pneg %p34
        $region34: #{tpu_custom_call.1} parent=31 // pred_check_branch
          %183 = sbr.rel (%p181) target = $region36
        $region35: #{tpu_custom_call.1} parent=31 // pred_region
          %p184 = scmp.lt.s32.totalorder %s14, 1
          %s185 = scalar_select %p184, %s14, 1
          %s186 = smul.addr %s185, 8
          %s187 = scalar_lea.vmem %s0, %s186
        $region36: #{tpu_custom_call.1} parent=31 // pred_fallthru
          _
      $region32: #{tpu_custom_call.1} parent=5 // pred_fallthru
        _
      %p188 = scmp.le.s32.totalorder 1, %s14
      %p189 = scmp.lt.s32.totalorder %s14, 3
      %p190 = pnand %p188, %p189
      %p191 = pneg %p190
      // Predicated region
      $region37: #{tpu_custom_call.1} parent=5 // pred_check
        _
      $region38: #{tpu_custom_call.1} parent=5 // pred_check_branch
        %193 = sbr.rel (%p190) target = $region40
      $region39: #{tpu_custom_call.1} parent=5 // pred_region
        %s194 = ssub.s32 %s14, 1
        %p195 = scmp.lt.s32.totalorder %s19, 1
        %s196 = scalar_select %p195, %s19, 1
        %s197 = smul.addr %s196, 8
        %s198 = scalar_lea.vmem %s0, %s197
        %p199 = pneg %p40
        %p200 = pneg %p37
        %p201 = pneg %p61
        %p202 = pneg %p58
        %p203 = pneg %p82
        %p204 = pneg %p79
        %p205 = pneg %p103
        %p206 = pneg %p100
        %p207 = pneg %p124
        %p208 = pneg %p121
        %p209 = pneg %p150
        %p210 = pneg %p147
        %s211 = sand.u32 %s137, 1
        %s212 = scalar_lea.sflag [#allocation3], %s211
        %s213 = sand.u32 %s137, 1
        %s214 = smul.addr %s213, 8
        %s215 = scalar_lea.vmem [#allocation2], %s214
        %p216 = scmp.lt.s32.totalorder %s19, 1
        %s217 = scalar_select %p216, %s19, 1
        %s218 = smul.addr %s217, 8
        %s219 = scalar_lea.vmem %s0, %s218
        %v221 = vld [vmem:[%s219] sm:$0xff]
        %v222 = vpack.c.bf16 %v221, %v221
        %v223 = vld [vmem:[%s1] sm:$0xff]
        %v224 = vld [vmem:[%s1 + $0x8] sm:$0xff]
        %v225 = vld [vmem:[%s1 + $0x10] sm:$0x33]
        %v226 = vld [vmem:[%s2] sm:$0x3]
        %v228 = vlaneseq
        %v229 = vshrl.u32 %v228, 7
        %v230 = vsub.s32 0, %v229
        %v231 = vrot.slane %v226, %v230
        %v232 = vlaneseq
        %v233 = vshrl.u32 %v232, 7
        %v234 = vsub.s32 1, %v233
        %v235 = vrot.slane %v226, %v234
        %v241 = vunpack.c.l.b16 %v223
        %v242 = vunpack.c.h.b16 %v223
        %v243 = vunpack.c.l.b16 %v224
        %v244 = vunpack.c.h.b16 %v224
        %v245 = vunpack.c.l.b16 %v225
        %v246 = vunpack.c.h.b16 %v225
        %v247 = vpack.c.b16 %v243, %v241
        %v248 = vpack.c.b16 %v244, %v242
        %v249 = vpack.c.b16 %v245, %v245
        %v250 = vpack.c.b16 %v246, %v246
        %vm253 = vcmask 162816
        %v255 = vsel %vm253, %v222, 0
        %vm257 = vcmask 1041408
        %v259 = vsel %vm257, %v249, 0
        %v262 = vsel %vm257, %v250, 0
        %264 = vmatprep.subr.bf16.mxu0 %v248
        %265 = vmatpush1.bf16.msra.mxu0 %v247
        %266 = vmatprep.subr.bf16.mxu0 %v262
        %267 = vmatpush1.bf16.msra.mxu0 %v259
        %268 = vmatprep.subr.bf16.mxu0 0
        %269 = vmatpush1.bf16.msra.mxu0 0
        %270 = vmatprep.subr.bf16.mxu0 0
        %271 = vmatpush1.bf16.msra.mxu0 0
        %272 = vmatprep.subr.bf16.mxu0 0
        %273 = vmatpush1.bf16.msra.mxu0 0
        %274 = vmatprep.subr.bf16.mxu0 0
        %275 = vmatpush1.bf16.msra.mxu0 0
        %276 = vmatprep.subr.bf16.mxu0 0
        %277 = vmatpush1.bf16.msra.mxu0 0
        %278 = vmatprep.subr.bf16.mxu0 0
        %279 = vmatpush1.bf16.msra.mxu0 0
        %280 = vmatprep.subr.bf16.mxu0 0
        %281 = vmatpush1.bf16.msra.mxu0 0
        %282 = vmatprep.subr.bf16.mxu0 0
        %283 = vmatpush1.bf16.msra.mxu0 0
        %284 = vmatprep.subr.bf16.mxu0 0
        %285 = vmatpush1.bf16.msra.mxu0 0
        %286 = vmatprep.subr.bf16.mxu0 0
        %287 = vmatpush1.bf16.msra.mxu0 0
        %288 = vmatprep.subr.bf16.mxu0 0
        %289 = vmatpush1.bf16.msra.mxu0 0
        %290 = vmatprep.subr.bf16.mxu0 0
        %291 = vmatpush1.bf16.msra.mxu0 0
        %292 = vmatprep.subr.bf16.mxu0 0
        %293 = vmatpush1.bf16.msra.mxu0 0
        %294 = vmatprep.subr.bf16.mxu0 0
        %295 = vmatpush1.bf16.msra.mxu0 0
        %296 = vmatprep.mubr.bf16.mxu0 0
        %297 = vmatmul.mubr.bf16.gmra.mrb[0].mxu0 %v255
        %v298 = vpop.f32.mrb[0].mxu0
        %v299 = vadd.f32 %v231, %v298
        %v300 = vpop.f32.mrb[0].mxu0
        %v301 = vadd.f32 %v235, %v300
        %v302 = vpop.f32.mrb[0].mxu0
        %v303 = vpop.f32.mrb[0].mxu0
        %304 = vdwg.mxu0
        %v305 = vmax.f32 %v299, 0.0
        %v306 = vmax.f32 %v301, 0.0
        %v307 = vpack.c.bf16 %v305, %v305
        %v308 = vpack.c.bf16 %v306, %v306
        %v309 = vld [vmem:[%s3] sm:$0xf]
        %v310 = vld [vmem:[%s3 + $0x4] sm:$0xf]
        %v311 = vld [vmem:[%s3 + $0x8] sm:$0xf]
        %v312 = vld [vmem:[%s3 + $0xc] sm:$0xf]
        %v313 = vld [vmem:[%s3 + $0x10] sm:$0xf]
        %v314 = vld [vmem:[%s3 + $0x14] sm:$0xf]
        %v315 = vld [vmem:[%s3 + $0x18] sm:$0xf]
        %v316 = vld [vmem:[%s3 + $0x1c] sm:$0xf]
        %v317 = vld [vmem:[%s3 + $0x20] sm:$0xf]
        %v318 = vld [vmem:[%s3 + $0x24] sm:$0xf]
        %v319 = vld [vmem:[%s3 + $0x28] sm:$0xf]
        %v320 = vld [vmem:[%s3 + $0x2c] sm:$0xf]
        %v321 = vld [vmem:[%s3 + $0x30] sm:$0xf]
        %v322 = vld [vmem:[%s3 + $0x34] sm:$0xf]
        %v323 = vld [vmem:[%s3 + $0x38] sm:$0xf]
        %v324 = vld [vmem:[%s3 + $0x3c] sm:$0xf]
        %v325 = vld [vmem:[%s3 + $0x40] sm:$0xf]
        %v326 = vld [vmem:[%s3 + $0x44] sm:$0xf]
        %v327 = vld [vmem:[%s3 + $0x48] sm:$0xf]
        %v328 = vld [vmem:[%s3 + $0x4c] sm:$0xf]
        %v329 = vld [vmem:[%s3 + $0x50] sm:$0xf]
        %v330 = vld [vmem:[%s3 + $0x54] sm:$0xf]
        %v331 = vld [vmem:[%s3 + $0x58] sm:$0xf]
        %v332 = vld [vmem:[%s3 + $0x5c] sm:$0xf]
        %v333 = vld [vmem:[%s3 + $0x60] sm:$0xf]
        %v334 = vld [vmem:[%s3 + $0x64] sm:$0xf]
        %v335 = vld [vmem:[%s3 + $0x68] sm:$0xf]
        %v336 = vld [vmem:[%s3 + $0x6c] sm:$0xf]
        %v337 = vld [vmem:[%s3 + $0x70] sm:$0xf]
        %v338 = vld [vmem:[%s3 + $0x74] sm:$0xf]
        %v339 = vld [vmem:[%s3 + $0x78] sm:$0xf]
        %v340 = vld [vmem:[%s3 + $0x7c] sm:$0xf]
        %v341 = vld [vmem:[%s4] sm:$0x1]
        %v343 = vlaneseq
        %v344 = vshrl.u32 %v343, 7
        %v345 = vsub.s32 0, %v344
        %v346 = vrot.slane %v341, %v345
        %v380 = vunpack.c.l.b16 %v309
        %v381 = vunpack.c.l.b16 %v310
        %v382 = vunpack.c.l.b16 %v311
        %v383 = vunpack.c.l.b16 %v312
        %v384 = vunpack.c.l.b16 %v313
        %v385 = vunpack.c.l.b16 %v314
        %v386 = vunpack.c.l.b16 %v315
        %v387 = vunpack.c.l.b16 %v316
        %v388 = vunpack.c.l.b16 %v317
        %v389 = vunpack.c.l.b16 %v318
        %v390 = vunpack.c.l.b16 %v319
        %v391 = vunpack.c.l.b16 %v320
        %v392 = vunpack.c.l.b16 %v321
        %v393 = vunpack.c.l.b16 %v322
        %v394 = vunpack.c.l.b16 %v323
        %v395 = vunpack.c.l.b16 %v324
        %v396 = vunpack.c.l.b16 %v325
        %v397 = vunpack.c.l.b16 %v326
        %v398 = vunpack.c.l.b16 %v327
        %v399 = vunpack.c.l.b16 %v328
        %v400 = vunpack.c.l.b16 %v329
        %v401 = vunpack.c.l.b16 %v330
        %v402 = vunpack.c.l.b16 %v331
        %v403 = vunpack.c.l.b16 %v332
        %v404 = vunpack.c.l.b16 %v333
        %v405 = vunpack.c.l.b16 %v334
        %v406 = vunpack.c.l.b16 %v335
        %v407 = vunpack.c.l.b16 %v336
        %v408 = vunpack.c.l.b16 %v337
        %v409 = vunpack.c.l.b16 %v338
        %v410 = vunpack.c.l.b16 %v339
        %v411 = vunpack.c.l.b16 %v340
        %v412 = vpack.c.b16 %v381, %v380
        %v413 = vpack.c.b16 %v383, %v382
        %v414 = vpack.c.b16 %v385, %v384
        %v415 = vpack.c.b16 %v387, %v386
        %v416 = vpack.c.b16 %v389, %v388
        %v417 = vpack.c.b16 %v391, %v390
        %v418 = vpack.c.b16 %v393, %v392
        %v419 = vpack.c.b16 %v395, %v394
        %v420 = vpack.c.b16 %v397, %v396
        %v421 = vpack.c.b16 %v399, %v398
        %v422 = vpack.c.b16 %v401, %v400
        %v423 = vpack.c.b16 %v403, %v402
        %v424 = vpack.c.b16 %v405, %v404
        %v425 = vpack.c.b16 %v407, %v406
        %v426 = vpack.c.b16 %v409, %v408
        %v427 = vpack.c.b16 %v411, %v410
        %444 = vmatprep.subr.bf16.mxu0 0
        %445 = vmatpush1.bf16.msra.mxu0 %v412
        %446 = vmatprep.subr.bf16.mxu0 0
        %447 = vmatpush1.bf16.msra.mxu0 %v413
        %448 = vmatprep.subr.bf16.mxu0 0
        %449 = vmatpush1.bf16.msra.mxu0 %v414
        %450 = vmatprep.subr.bf16.mxu0 0
        %451 = vmatpush1.bf16.msra.mxu0 %v415
        %452 = vmatprep.subr.bf16.mxu0 0
        %453 = vmatpush1.bf16.msra.mxu0 %v416
        %454 = vmatprep.subr.bf16.mxu0 0
        %455 = vmatpush1.bf16.msra.mxu0 %v417
        %456 = vmatprep.subr.bf16.mxu0 0
        %457 = vmatpush1.bf16.msra.mxu0 %v418
        %458 = vmatprep.subr.bf16.mxu0 0
        %459 = vmatpush1.bf16.msra.mxu0 %v419
        %460 = vmatprep.subr.bf16.mxu0 0
        %461 = vmatpush1.bf16.msra.mxu0 %v420
        %462 = vmatprep.subr.bf16.mxu0 0
        %463 = vmatpush1.bf16.msra.mxu0 %v421
        %464 = vmatprep.subr.bf16.mxu0 0
        %465 = vmatpush1.bf16.msra.mxu0 %v422
        %466 = vmatprep.subr.bf16.mxu0 0
        %467 = vmatpush1.bf16.msra.mxu0 %v423
        %468 = vmatprep.subr.bf16.mxu0 0
        %469 = vmatpush1.bf16.msra.mxu0 %v424
        %470 = vmatprep.subr.bf16.mxu0 0
        %471 = vmatpush1.bf16.msra.mxu0 %v425
        %472 = vmatprep.subr.bf16.mxu0 0
        %473 = vmatpush1.bf16.msra.mxu0 %v426
        %474 = vmatprep.subr.bf16.mxu0 0
        %475 = vmatpush1.bf16.msra.mxu0 %v427
        %476 = vmatprep.mubr.bf16.mxu0 %v308
        %477 = vmatmul.mubr.bf16.gmra.mrb[0].mxu0 %v307
        %v478 = vpop.f32.mrb[0].mxu0
        %v479 = vadd.f32 %v346, %v478
        %v480 = vpop.f32.mrb[0].mxu0
        %v481 = vpop.f32.mrb[0].mxu0
        %v482 = vpop.f32.mrb[0].mxu0
        %483 = vdwg.mxu0
        %vm484 = vcmask 80896
        %485 = vst.msk [vmem:[%s215] sm:$0xff] %vm484, %v479
        %s486 = sand.u32 %s137, 1
        %s487 = scalar_lea.sflag [#allocation3], %s486
        %s488 = sand.u32 %s137, 1
        %s489 = smul.addr %s488, 8
        %s490 = scalar_lea.vmem [#allocation2], %s489
        // Predicated region
        $region41: #{tpu_custom_call.1} parent=39 // pred_check
          %p491 = pneg %p147
        $region42: #{tpu_custom_call.1} parent=39 // pred_check_branch
          %493 = sbr.rel (%p491) target = $region44
        $region43: #{tpu_custom_call.1} parent=39 // pred_region
          %s495 = ssub.s32 128, 128
          %496 = vsyncadd %s487, %s495
          %s497 = smul.addr %s19, 128
          %s498 = scalar_lea.hbm %s5, %s497
          %s500 = sshll.u32 %s490, 4
          %s501 = int_to_ptr.vmem [resolvable:$true] %s500
          %503 = dma.vmem_to_hbm [thread:$0]  %s501, 128, %s498, %s487
        $region44: #{tpu_custom_call.1} parent=39 // pred_fallthru
          _
      $region40: #{tpu_custom_call.1} parent=5 // pred_fallthru
        _
      %p504 = scmp.le.s32.totalorder 2, %s14
      // Predicated region
      $region45: #{tpu_custom_call.1} parent=5 // pred_check
        %p505 = pneg %p504
      $region46: #{tpu_custom_call.1} parent=5 // pred_check_branch
        %507 = sbr.rel (%p505) target = $region48
      $region47: #{tpu_custom_call.1} parent=5 // pred_region
        %s508 = ssub.s32 %s14, 2
        // Predicated region
        $region49: #{tpu_custom_call.1} parent=47 // pred_check
          %p509 = pneg %p153
        $region50: #{tpu_custom_call.1} parent=47 // pred_check_branch
          %511 = sbr.rel (%p509) target = $region52
        $region51: #{tpu_custom_call.1} parent=47 // pred_region
          %s512 = sand.u32 %s138, 1
          %s513 = scalar_lea.sflag [#allocation3], %s512
          %s514 = sand.u32 %s138, 1
          %s515 = smul.addr %s514, 8
          %s516 = scalar_lea.vmem [#allocation2], %s515
          %517 = dma.done %s513, 128
        $region52: #{tpu_custom_call.1} parent=47 // pred_fallthru
          _
      $region48: #{tpu_custom_call.1} parent=5 // pred_fallthru
        _
    $region6: #{tpu_custom_call.1} parent=1 // loop_footer
      %s18 = sadd.s32 1, %s14
    $region7: #{tpu_custom_call.1} parent=1 // loop_footer_branch
      %13 = sbr.rel target = $region3
    $region8: #{tpu_custom_call.1} parent=1 // loop_exit
      _
    %518 = vsyncpa [#allocation3], 1
    %s519 = scalar_lea.sflag [#allocation3], 1
    %520 = vsyncpa %s519, 1

</llo_original>
